<compile_context>
chip_gen: v7x
topology: tpu7x:2x2x1
jax: 0.10.0
libtpu: 0.0.40
codegen_flags: <defaults>
</compile_context>

<pallas_src>
import functools

import jax
import jax.numpy as jnp
from jax.experimental import pallas as pl
from jax.experimental.pallas import tpu as pltpu


def _round_up(x, m):
    return ((x + m - 1) // m) * m


def _choose_token_tile(M, H, P, vmem_budget_bytes):
    """Largest token-tile (multiple of 8) whose working set fits the budget."""
    resident = (P * H + 2 * H) * 4                     # table + gamma + beta (f32)
    for tM in (1024, 512, 256, 128, 64, 32, 16, 8):
        # feat in + out, double-buffered, f32; ids double-buffered, i32;
        # plus ~3 f32 (tM, H) temporaries live inside the body.
        tile_bytes = 2 * 2 * tM * H * 4 + 2 * tM * 4 + 3 * tM * H * 4
        if resident + tile_bytes <= vmem_budget_bytes or tM == 8:
            return min(tM, _round_up(M, 8))
    return 8


def _graph_bert_embeddings_kernel(ids_ref, feat_ref, table_ref, gamma_ref,
                                  beta_ref, o_ref, *, eps):
    # ids_ref:   (tM, 1) int32     -- position ids for this token tile
    # feat_ref:  (tM, H)           -- raw feature embeddings tile
    # table_ref: (P, H)            -- full position-embedding table (resident)
    # gamma/beta:(1, H)            -- LayerNorm affine params (resident)
    # o_ref:     (tM, H)
    tM = feat_ref.shape[0]
    P, H = table_ref.shape

    # --- Embedding gather via one-hot matmul on the MXU (exact) ---
    ids = ids_ref[...]                                        # (tM, 1)
    iota_p = jax.lax.broadcasted_iota(jnp.int32, (tM, P), 1)  # (tM, P)
    one_hot = (ids == iota_p).astype(jnp.float32)             # (tM, P)
    pos_emb = jnp.dot(one_hot, table_ref[...].astype(jnp.float32),
                      preferred_element_type=jnp.float32)     # (tM, H)

    # --- Add raw feature embeddings ---
    emb = feat_ref[...].astype(jnp.float32) + pos_emb

    # --- LayerNorm over the hidden axis (f32, sums * 1/H, centered variance) ---
    inv_h = jnp.float32(1.0 / H)
    mean = jnp.sum(emb, axis=-1, keepdims=True) * inv_h
    centered = emb - mean
    var = jnp.sum(centered * centered, axis=-1, keepdims=True) * inv_h
    inv_std = jax.lax.rsqrt(var + jnp.float32(eps))            # EUP
    # Fold gamma into the per-row scale: one fused multiply-add per element.
    out = centered * (inv_std * gamma_ref[...]) + beta_ref[...]

    # --- Dropout: identity in eval mode ---
    o_ref[...] = out.astype(o_ref.dtype)


def graph_bert_embeddings(raw_feature_embeds, init_pos_ids, pos_table,
                          gamma, beta, *, eps=1e-12):
    B, S, H = raw_feature_embeds.shape
    P, H_t = pos_table.shape
    assert H_t == H
    M = B * S

    feat = raw_feature_embeds.reshape(M, H)
    ids = init_pos_ids.reshape(M, 1).astype(jnp.int32)

    # Token-tile size: big enough to amortize the ~0.35us/step overhead, small
    # enough to double-buffer comfortably on every generation (incl. v7x with
    # 64 MiB physical VMEM).
    vmem_limit = 32 * 1024 * 1024
    tM = _choose_token_tile(M, H, P, vmem_limit // 2)
    M_pad = _round_up(M, tM)
    if M_pad != M:
        feat = jnp.pad(feat, ((0, M_pad - M), (0, 0)))
        ids = jnp.pad(ids, ((0, M_pad - M), (0, 0)))   # pad with id 0 (valid row)

    grid = (M_pad // tM,)
    kernel = functools.partial(_graph_bert_embeddings_kernel, eps=eps)

    out = pl.pallas_call(
        kernel,
        out_shape=jax.ShapeDtypeStruct((M_pad, H), raw_feature_embeds.dtype),
        grid_spec=pltpu.PrefetchScalarGridSpec(
            num_scalar_prefetch=0,
            grid=grid,
            in_specs=[
                pl.BlockSpec((tM, 1), lambda i: (i, 0)),   # ids (tiled)
                pl.BlockSpec((tM, H), lambda i: (i, 0)),   # features (tiled)
                pl.BlockSpec((P, H), lambda i: (0, 0)),    # table (resident)
                pl.BlockSpec((1, H), lambda i: (0, 0)),    # gamma (resident)
                pl.BlockSpec((1, H), lambda i: (0, 0)),    # beta  (resident)
            ],
            out_specs=pl.BlockSpec((tM, H), lambda i: (i, 0)),
        ),
        compiler_params=pltpu.CompilerParams(
            dimension_semantics=("parallel",),
            vmem_limit_bytes=vmem_limit,
        ),
    )(ids, feat, pos_table, gamma.reshape(1, H), beta.reshape(1, H))

    return out[:M].reshape(B, S, H)


def _reference(raw_feature_embeds, init_pos_ids, pos_table, gamma, beta, eps=1e-12):
    pos = pos_table[init_pos_ids]
    emb = raw_feature_embeds + pos
    mean = jnp.mean(emb, axis=-1, keepdims=True)
    var = jnp.mean((emb - mean) ** 2, axis=-1, keepdims=True)
    normed = (emb - mean) / jnp.sqrt(var + eps)
    return normed * gamma + beta


if __name__ == "__main__":
    # Small config: batch=2, seq=8, hidden=32, max_inti_pos_index=16
    B, S, H, P = 2, 8, 32, 16
    eps = 1e-12

    key = jax.random.PRNGKey(0)
    k_feat, k_ids, k_table = jax.random.split(key, 3)

    raw_feature_embeds = jax.random.normal(k_feat, (B, S, H), dtype=jnp.float32)
    init_pos_ids = jax.random.randint(k_ids, (B, S), 0, P, dtype=jnp.int32)

    # Deterministic synthetic parameters (nn.Embedding / nn.LayerNorm shapes)
    pos_table = jax.random.normal(k_table, (P, H), dtype=jnp.float32)
    gamma = jnp.ones((H,), dtype=jnp.float32)
    beta = jnp.zeros((H,), dtype=jnp.float32)

    out = graph_bert_embeddings(raw_feature_embeds, init_pos_ids, pos_table,
                                gamma, beta, eps=eps)
    out = jax.block_until_ready(out)

    ref = _reference(raw_feature_embeds, init_pos_ids, pos_table, gamma, beta, eps)
    assert out.shape == (B, S, H)
    assert jnp.allclose(out, ref, atol=1e-5, rtol=1e-5), "mismatch vs reference"

    print("KERNEL_OK")
</pallas_src>

<mosaic_0001>
module attributes {stable_mosaic.version = 11 : i64} {
  func.func @_graph_bert_embeddings_kernel(%arg0: i32, %arg1: memref<16x1xi32, #tpu.memory_space<vmem>>, %arg2: memref<16x32xf32, #tpu.memory_space<vmem>>, %arg3: memref<16x32xf32, #tpu.memory_space<vmem>>, %arg4: memref<1x32xf32, #tpu.memory_space<vmem>>, %arg5: memref<1x32xf32, #tpu.memory_space<vmem>>, %arg6: memref<16x32xf32, #tpu.memory_space<vmem>>) attributes {dimension_semantics = [#tpu.dimension_semantics<parallel>], iteration_bounds = array<i64: 1>, scalar_prefetch = 0 : i64, scratch_operands = 0 : i64, tpu.core_type = #tpu.core_type<tc>, window_params = [{transform_indices = @transform_0, window_bounds = array<i64: 16, 1>}, {transform_indices = @transform_1, window_bounds = array<i64: 16, 32>}, {pipeline_mode = #tpu.pipeline_mode<synchronous>, transform_indices = @transform_2, window_bounds = array<i64: 16, 32>}, {pipeline_mode = #tpu.pipeline_mode<synchronous>, transform_indices = @transform_3, window_bounds = array<i64: 1, 32>}, {pipeline_mode = #tpu.pipeline_mode<synchronous>, transform_indices = @transform_4, window_bounds = array<i64: 1, 32>}, {transform_indices = @transform_5, window_bounds = array<i64: 16, 32>}]} {
    %c0 = arith.constant 0 : index
    %c0_0 = arith.constant 0 : index
    %0 = vector.load %arg1[%c0, %c0_0] : memref<16x1xi32, #tpu.memory_space<vmem>>, vector<16x1xi32>
    %1 = tpu.iota {dimensions = array<i32: 1>} : vector<16x16xi32>
    %2 = vector.broadcast %0 : vector<16x1xi32> to vector<16x16xi32>
    %3 = arith.cmpi eq, %2, %1 : vector<16x16xi32>
    %4 = arith.extui %3 : vector<16x16xi1> to vector<16x16xi32>
    %5 = arith.sitofp %4 : vector<16x16xi32> to vector<16x16xf32>
    %c0_1 = arith.constant 0 : index
    %c0_2 = arith.constant 0 : index
    %6 = vector.load %arg3[%c0_1, %c0_2] : memref<16x32xf32, #tpu.memory_space<vmem>>, vector<16x32xf32>
    %cst = arith.constant dense<0.000000e+00> : vector<16x32xf32>
    %7 = tpu.matmul %5, %6, %cst {dimension_numbers = #tpu.dot_dimension_numbers<[1], [0], [0], [1], [0, 0, 1, 1], [], []>} : vector<16x16xf32>, vector<16x32xf32>, vector<16x32xf32> -> vector<16x32xf32>
    %c0_3 = arith.constant 0 : index
    %c0_4 = arith.constant 0 : index
    %8 = vector.load %arg2[%c0_3, %c0_4] : memref<16x32xf32, #tpu.memory_space<vmem>>, vector<16x32xf32>
    %9 = arith.addf %8, %7 : vector<16x32xf32>
    %cst_5 = arith.constant dense<0.000000e+00> : vector<16xf32>
    %10 = vector.multi_reduction <add>, %9, %cst_5 [1] : vector<16x32xf32> to vector<16xf32>
    %11 = vector.shape_cast %10 : vector<16xf32> to vector<16x1xf32>
    %cst_6 = arith.constant 3.125000e-02 : f32
    %12 = vector.broadcast %cst_6 : f32 to vector<16x1xf32>
    %13 = arith.mulf %11, %12 : vector<16x1xf32>
    %14 = vector.broadcast %13 : vector<16x1xf32> to vector<16x32xf32>
    %15 = arith.subf %9, %14 : vector<16x32xf32>
    %16 = arith.mulf %15, %15 : vector<16x32xf32>
    %cst_7 = arith.constant dense<0.000000e+00> : vector<16xf32>
    %17 = vector.multi_reduction <add>, %16, %cst_7 [1] : vector<16x32xf32> to vector<16xf32>
    %18 = vector.shape_cast %17 : vector<16xf32> to vector<16x1xf32>
    %cst_8 = arith.constant 3.125000e-02 : f32
    %19 = vector.broadcast %cst_8 : f32 to vector<16x1xf32>
    %20 = arith.mulf %18, %19 : vector<16x1xf32>
    %cst_9 = arith.constant 9.99999996E-13 : f32
    %21 = vector.broadcast %cst_9 : f32 to vector<16x1xf32>
    %22 = arith.addf %20, %21 : vector<16x1xf32>
    %23 = math.rsqrt %22 : vector<16x1xf32>
    %c0_10 = arith.constant 0 : index
    %c0_11 = arith.constant 0 : index
    %24 = vector.load %arg4[%c0_10, %c0_11] : memref<1x32xf32, #tpu.memory_space<vmem>>, vector<1x32xf32>
    %25 = vector.broadcast %23 : vector<16x1xf32> to vector<16x32xf32>
    %26 = vector.broadcast %24 : vector<1x32xf32> to vector<16x32xf32>
    %27 = arith.mulf %25, %26 : vector<16x32xf32>
    %28 = arith.mulf %15, %27 : vector<16x32xf32>
    %c0_12 = arith.constant 0 : index
    %c0_13 = arith.constant 0 : index
    %29 = vector.load %arg5[%c0_12, %c0_13] : memref<1x32xf32, #tpu.memory_space<vmem>>, vector<1x32xf32>
    %30 = vector.broadcast %29 : vector<1x32xf32> to vector<16x32xf32>
    %31 = arith.addf %28, %30 : vector<16x32xf32>
    %c0_14 = arith.constant 0 : index
    %c0_15 = arith.constant 0 : index
    %32 = vector.load %arg6[%c0_14, %c0_15] : memref<16x32xf32, #tpu.memory_space<vmem>>, vector<16x32xf32>
    tpu.vector_store %arg6[%c0_14, %c0_15], %31 {strides = array<i32>} : memref<16x32xf32, #tpu.memory_space<vmem>>, vector<16x32xf32>,
    return
  }
  func.func @transform_0(%arg0: i32) -> (i32, i32) {
    %c0_i32 = arith.constant 0 : i32
    %c0_i32_0 = arith.constant 0 : i32
    return %arg0, %c0_i32 : i32, i32
  }
  func.func @transform_1(%arg0: i32) -> (i32, i32) {
    %c0_i32 = arith.constant 0 : i32
    %c0_i32_0 = arith.constant 0 : i32
    return %arg0, %c0_i32 : i32, i32
  }
  func.func @transform_2(%arg0: i32) -> (i32, i32) {
    %c0_i32 = arith.constant 0 : i32
    %c0_i32_0 = arith.constant 0 : i32
    %c0_i32_1 = arith.constant 0 : i32
    return %c0_i32, %c0_i32_0 : i32, i32
  }
  func.func @transform_3(%arg0: i32) -> (i32, i32) {
    %c0_i32 = arith.constant 0 : i32
    %c0_i32_0 = arith.constant 0 : i32
    %c0_i32_1 = arith.constant 0 : i32
    return %c0_i32, %c0_i32_0 : i32, i32
  }
  func.func @transform_4(%arg0: i32) -> (i32, i32) {
    %c0_i32 = arith.constant 0 : i32
    %c0_i32_0 = arith.constant 0 : i32
    %c0_i32_1 = arith.constant 0 : i32
    return %c0_i32, %c0_i32_0 : i32, i32
  }
  func.func @transform_5(%arg0: i32) -> (i32, i32) {
    %c0_i32 = arith.constant 0 : i32
    %c0_i32_0 = arith.constant 0 : i32
    return %arg0, %c0_i32 : i32, i32
  }
}

</mosaic_0001>

<llo_original>
// kernel: tpu_custom_call.1
$region0: #{tpu_custom_call.1}
  #allocation0 [shape = 'u32[]', space=smem, size = 0x4, offset = 0x4, fixed_abs, tag = 'smem constant byte address 0x4 - core index']
  #allocation1 [shape = 'u32[144,128]{1,0:T(1,128)}', space=vmem, size = 0x12000, scoped, tag = 'internal scratch']
  %s0 = inlined_call_operand.vmem [shape: s32[16,1], index: 0, kind: input, shape index: {}]
  %s1 = inlined_call_operand.vmem [shape: f32[16,32], index: 1, kind: input, shape index: {}]
  %s2 = inlined_call_operand.hbm [shape: f32[16,32], index: 2, kind: input, shape index: {}]
  %s3 = inlined_call_operand.vmem [shape: f32[1,32], index: 3, kind: input, shape index: {}]
  %s4 = inlined_call_operand.vmem [shape: f32[1,32], index: 4, kind: input, shape index: {}]
  %s5 = inlined_call_operand.hbm [shape: f32[16,32], index: 5, kind: output, shape index: {}]
  %s6 = sld [smem:[#allocation0]]
  $region34: #{tpu_custom_call.1} parent=0
    _
  %s8 = ssub.s32 1, %s6
  %s9 = scalar_select 0, %s8, %s6
  $region1: #{tpu_custom_call.1} parent=0
    #allocation2 [shape = 'u8[8192]{0}', space=vmem, size = 0x2000, scoped, tag = 'input window, operand 2, single buffered']
    #allocation3 [shape = 's32[1]{0}', space=sflag, size = 0x4, scoped, tag = 'scoped memory for tpu_custom_call.1']
    #allocation4 [shape = 's32[1]{0}', space=sflag, size = 0x4, scoped, tag = 'scoped memory for tpu_custom_call.1']
    #allocation5 [shape = 'u8[8192]{0}', space=vmem, size = 0x2000, scoped, tag = 'output window, operand 0, single buffered']
    %10 = vsyncpa [#allocation3], 0
    %11 = vsyncpa [#allocation4], 0
    // Predicated region
    $region2: #{tpu_custom_call.1} parent=1 // pred_check
      _
    $region3: #{tpu_custom_call.1} parent=1 // pred_check_branch
      %13 = sbr.rel (0) target = $region5
    $region4: #{tpu_custom_call.1} parent=1 // pred_region
      _
    $region5: #{tpu_custom_call.1} parent=1 // pred_fallthru
      _
    // Predicated region
    $region6: #{tpu_custom_call.1} parent=1 // pred_check
      _
    $region7: #{tpu_custom_call.1} parent=1 // pred_check_branch
      %15 = sbr.rel (0) target = $region9
    $region8: #{tpu_custom_call.1} parent=1 // pred_region
      _
    $region9: #{tpu_custom_call.1} parent=1 // pred_fallthru
      _
    // Predicated region
    $region10: #{tpu_custom_call.1} parent=1 // pred_check
      _
    $region11: #{tpu_custom_call.1} parent=1 // pred_check_branch
      %17 = sbr.rel (0) target = $region13
    $region12: #{tpu_custom_call.1} parent=1 // pred_region
      %s19 = ssub.s32 256, 256
      %20 = vsyncadd [#allocation3], %s19
      %s21 = sshll.u32 [#allocation2], 4
      %s22 = int_to_ptr.vmem [resolvable:$true] %s21
      %27 = dma.hbm_to_vmem [thread:$0]  %s2, 256, %s22, [#allocation3], 128, 128, 8
    $region13: #{tpu_custom_call.1} parent=1 // pred_fallthru
      _
    // Predicated region
    $region14: #{tpu_custom_call.1} parent=1 // pred_check
      _
    $region15: #{tpu_custom_call.1} parent=1 // pred_check_branch
      %29 = sbr.rel (0) target = $region17
    $region16: #{tpu_custom_call.1} parent=1 // pred_region
      _
    $region17: #{tpu_custom_call.1} parent=1 // pred_fallthru
      _
    // Predicated region
    $region18: #{tpu_custom_call.1} parent=1 // pred_check
      _
    $region19: #{tpu_custom_call.1} parent=1 // pred_check_branch
      %31 = sbr.rel (0) target = $region21
    $region20: #{tpu_custom_call.1} parent=1 // pred_region
      _
    $region21: #{tpu_custom_call.1} parent=1 // pred_fallthru
      _
    // Predicated region
    $region22: #{tpu_custom_call.1} parent=1 // pred_check
      _
    $region23: #{tpu_custom_call.1} parent=1 // pred_check_branch
      %33 = sbr.rel (0) target = $region25
    $region24: #{tpu_custom_call.1} parent=1 // pred_region
      %34 = dma.done [#allocation3], 256
    $region25: #{tpu_custom_call.1} parent=1 // pred_fallthru
      _
    %v35 = vld [vmem:[%s0] sm:$0xff]
    %v36 = vld [vmem:[%s0 + $0x8] sm:$0xff]
    %v37 = vlaneseq
    %v38 = vand.u32 %v37, 127
    %39 = vset.pattern.permute.xlu0 0
    %40 = vperm.xlu0 %39, %v35
    %v41 = vpop.permute.xlu0 %40
    %42 = vset.pattern.permute.xlu0 0
    %43 = vperm.xlu0 %42, %v36
    %v44 = vpop.permute.xlu0 %43
    %vm45 = vcmp.eq.s32.totalorder %v41, %v38
    %vm46 = vcmp.eq.s32.totalorder %v44, %v38
    %v47 = vsel %vm45, 1, 0
    %v48 = vsel %vm46, 1, 0
    %v49 = vcvt.s32.f32 %v47
    %v50 = vcvt.s32.f32 %v48
    %v51 = vld [vmem:[#allocation2] sm:$0xff]
    %v52 = vld [vmem:[#allocation2 + $0x8] sm:$0xff]
    %vm53 = vcmask 130048
    %v55 = vsel %vm53, %v49, 0
    %v58 = vsel %vm53, %v50, 0
    %60 = vmatprep.subr.mxu0 0.0
    %61 = vmatpush1.msra.mxu0 %v51
    %62 = vmatprep.subr.mxu0 0.0
    %63 = vmatpush1.msra.mxu0 %v52
    %64 = vmatprep.subr.mxu0 0.0
    %65 = vmatpush1.msra.mxu0 0.0
    %66 = vmatprep.subr.mxu0 0.0
    %67 = vmatpush1.msra.mxu0 0.0
    %68 = vmatprep.subr.mxu0 0.0
    %69 = vmatpush1.msra.mxu0 0.0
    %70 = vmatprep.subr.mxu0 0.0
    %71 = vmatpush1.msra.mxu0 0.0
    %72 = vmatprep.subr.mxu0 0.0
    %73 = vmatpush1.msra.mxu0 0.0
    %74 = vmatprep.subr.mxu0 0.0
    %75 = vmatpush1.msra.mxu0 0.0
    %76 = vmatprep.subr.mxu0 0.0
    %77 = vmatpush1.msra.mxu0 0.0
    %78 = vmatprep.subr.mxu0 0.0
    %79 = vmatpush1.msra.mxu0 0.0
    %80 = vmatprep.subr.mxu0 0.0
    %81 = vmatpush1.msra.mxu0 0.0
    %82 = vmatprep.subr.mxu0 0.0
    %83 = vmatpush1.msra.mxu0 0.0
    %84 = vmatprep.subr.mxu0 0.0
    %85 = vmatpush1.msra.mxu0 0.0
    %86 = vmatprep.subr.mxu0 0.0
    %87 = vmatpush1.msra.mxu0 0.0
    %88 = vmatprep.subr.mxu0 0.0
    %89 = vmatpush1.msra.mxu0 0.0
    %90 = vmatprep.subr.mxu0 0.0
    %91 = vmatpush1.msra.mxu0 0.0
    %92 = vmatprep.subr.mxu0 0.0
    %93 = vmatpush1.msra.mxu0 0.0
    %94 = vmatprep.subr.mxu0 0.0
    %95 = vmatpush1.msra.mxu0 0.0
    %96 = vmatprep.subr.mxu0 0.0
    %97 = vmatpush1.msra.mxu0 0.0
    %98 = vmatprep.subr.mxu0 0.0
    %99 = vmatpush1.msra.mxu0 0.0
    %100 = vmatprep.subr.mxu0 0.0
    %101 = vmatpush1.msra.mxu0 0.0
    %102 = vmatprep.subr.mxu0 0.0
    %103 = vmatpush1.msra.mxu0 0.0
    %104 = vmatprep.subr.mxu0 0.0
    %105 = vmatpush1.msra.mxu0 0.0
    %106 = vmatprep.subr.mxu0 0.0
    %107 = vmatpush1.msra.mxu0 0.0
    %108 = vmatprep.subr.mxu0 0.0
    %109 = vmatpush1.msra.mxu0 0.0
    %110 = vmatprep.subr.mxu0 0.0
    %111 = vmatpush1.msra.mxu0 0.0
    %112 = vmatprep.subr.mxu0 0.0
    %113 = vmatpush1.msra.mxu0 0.0
    %114 = vmatprep.subr.mxu0 0.0
    %115 = vmatpush1.msra.mxu0 0.0
    %116 = vmatprep.subr.mxu0 0.0
    %117 = vmatpush1.msra.mxu0 0.0
    %118 = vmatprep.subr.mxu0 0.0
    %119 = vmatpush1.msra.mxu0 0.0
    %120 = vmatprep.subr.mxu0 0.0
    %121 = vmatpush1.msra.mxu0 0.0
    %122 = vmatprep.subr.mxu0 0.0
    %123 = vmatpush1.msra.mxu0 0.0
    %124 = vmatprep.mubr.f32.mxu0 0.0
    %125 = vmatmul.mubr.f32.gmra.mrb[0].mxu0 %v55
    %v126 = vpop.f32.mrb[0].mxu0
    %v127 = vadd.f32 0.0, %v126
    %v128 = vpop.f32.mrb[0].mxu0
    %129 = vmatprep.mubr.f32.mxu0 0.0
    %130 = vmatmul.mubr.f32.gmra.mrb[0].mxu0 %v58
    %v131 = vpop.f32.mrb[0].mxu0
    %v132 = vadd.f32 0.0, %v131
    %v133 = vpop.f32.mrb[0].mxu0
    %134 = vdwg.mxu0
    %v135 = vld [vmem:[%s1] sm:$0xff]
    %v136 = vld [vmem:[%s1 + $0x8] sm:$0xff]
    %v137 = vadd.f32 %v135, %v127
    %v138 = vadd.f32 %v136, %v132
    %vm139 = vcmask 261120
    %v140 = vsel %vm139, %v137, 0.0
    %141 = vadd.xlane.f32.xlu0 %v140
    %v142 = vpop.xlane.xlu0 %141
    %v143 = vsel %vm139, %v138, 0.0
    %144 = vadd.xlane.f32.xlu0 %v143
    %v145 = vpop.xlane.xlu0 %144
    %v146 = vmul.f32 %v142, 0.03125
    %v147 = vmul.f32 %v145, 0.03125
    %v148 = vsub.f32 %v137, %v146
    %v149 = vsub.f32 %v138, %v147
    %v150 = vmul.f32 %v148, %v148
    %v151 = vmul.f32 %v149, %v149
    %v152 = vsel %vm139, %v150, 0.0
    %153 = vadd.xlane.f32.xlu0 %v152
    %v154 = vpop.xlane.xlu0 %153
    %v155 = vsel %vm139, %v151, 0.0
    %156 = vadd.xlane.f32.xlu0 %v155
    %v157 = vpop.xlane.xlu0 %156
    %v158 = vmul.f32 %v154, 0.03125
    %v159 = vmul.f32 %v157, 0.03125
    %v160 = vadd.f32 %v158, 1e-12
    %v161 = vadd.f32 %v159, 1e-12
    %v162 = vrsqrt.pop %v160
    %v163 = vrsqrt.pop %v161
    %v164 = vld [vmem:[%s3] sm:$0x1]
    %v166 = vlaneseq
    %v167 = vshrl.u32 %v166, 7
    %v168 = vsub.s32 0, %v167
    %v169 = vrot.slane %v164, %v168
    %v171 = vmul.f32 %v162, %v169
    %v172 = vmul.f32 %v163, %v169
    %v173 = vmul.f32 %v148, %v171
    %v174 = vmul.f32 %v149, %v172
    %v175 = vld [vmem:[%s4] sm:$0x1]
    %v177 = vlaneseq
    %v178 = vshrl.u32 %v177, 7
    %v179 = vsub.s32 0, %v178
    %v180 = vrot.slane %v175, %v179
    %v182 = vadd.f32 %v173, %v180
    %v183 = vadd.f32 %v174, %v180
    %184 = vst.msk [vmem:[#allocation5] sm:$0xff] %vm139, %v182
    %185 = vst.msk [vmem:[#allocation5 + $0x8] sm:$0xff] %vm139, %v183
    // Predicated region
    $region26: #{tpu_custom_call.1} parent=1 // pred_check
      _
    $region27: #{tpu_custom_call.1} parent=1 // pred_check_branch
      %187 = sbr.rel (0) target = $region29
    $region28: #{tpu_custom_call.1} parent=1 // pred_region
      %s189 = ssub.s32 256, 256
      %190 = vsyncadd [#allocation4], %s189
      %s191 = sshll.u32 [#allocation5], 4
      %s192 = int_to_ptr.vmem [resolvable:$true] %s191
      %197 = dma.vmem_to_hbm [thread:$0]  %s192, 256, %s5, [#allocation4], 128, 128, 8
    $region29: #{tpu_custom_call.1} parent=1 // pred_fallthru
      _
    // Predicated region
    $region30: #{tpu_custom_call.1} parent=1 // pred_check
      _
    $region31: #{tpu_custom_call.1} parent=1 // pred_check_branch
      %199 = sbr.rel (0) target = $region33
    $region32: #{tpu_custom_call.1} parent=1 // pred_region
      %200 = dma.done [#allocation4], 256
    $region33: #{tpu_custom_call.1} parent=1 // pred_fallthru
      _
    %201 = vsyncpa [#allocation3], 1
    %202 = vsyncpa [#allocation4], 1

</llo_original>
